<compile_context>
chip_gen: v5e
topology: v5e:2x2
jax: 0.10.0
libtpu: 0.0.40
codegen_flags: <defaults>
</compile_context>

<pallas_src>
import functools
import math

import jax
import jax.numpy as jnp
from jax.experimental import pallas as pl
from jax.experimental.pallas import tpu as pltpu


_MAX_BLOCK_ROWS = 512


def _cdiv(a: int, b: int) -> int:
    return -(-a // b)


def _round_up(a: int, b: int) -> int:
    return _cdiv(a, b) * b


def _vmem_capacity_bytes() -> int:
    """Per-TensorCore VMEM capacity; conservative (v7x) default on failure."""
    try:
        cap = int(getattr(pltpu.get_tpu_info(), "vmem_capacity_bytes"))
        if cap > 0:
            return cap
    except Exception:
        pass
    return 64 << 20


# ----------------------------- Pallas kernel -------------------------------

def _layernorm_kernel(x_ref, alpha_ref, beta_ref, o_ref, *, eps: float):
    """Row-wise LayerNorm matching the PyTorch reference exactly.

    x_ref   : VMEM tile [block_rows, D]   (last dim is the FULL hidden dim,
              so reductions need no column masking; a ragged last row-block is
              handled by Pallas — garbage tail rows are computed independently
              per row and their stores are discarded).
    alpha_ref / beta_ref : SMEM scalars of shape (1,)
    o_ref   : VMEM tile [block_rows, D]
    """
    x = x_ref[...].astype(jnp.float32)
    d = x.shape[-1]

    mean = jnp.sum(x, axis=-1, keepdims=True) * (1.0 / d)
    centered = x - mean

    # torch.std default is the unbiased estimator (N-1 denominator).
    var_unbiased = jnp.sum(centered * centered, axis=-1, keepdims=True) * (
        1.0 / (d - 1)
    )
    std = jnp.sqrt(var_unbiased)

    # Exact reciprocal on the EUP; fold alpha into the per-row [rows, 1] scale
    # so only one full-width VALU multiply remains.
    inv = pl.reciprocal(std + eps, approx=False)
    scale = alpha_ref[0] * inv
    o_ref[...] = (centered * scale + beta_ref[0]).astype(o_ref.dtype)


# ------------------------------- wrapper ------------------------------------

def pallas_layernorm(x, alpha, beta, *, eps: float = 1e-6):
    """Apply the custom LayerNorm over the last axis of `x` (any leading dims)."""
    orig_shape = x.shape
    d = orig_shape[-1]
    assert d > 1, "unbiased std (N-1) requires last dim > 1"

    rows = math.prod(orig_shape[:-1]) if len(orig_shape) > 1 else 1
    x2d = x.reshape(rows, d)

    itemsize = jnp.dtype(x.dtype).itemsize
    row_align = 16 if itemsize == 2 else 8  # bf16 packs [16, 128] per vreg

    # Generation-aware tile budget.
    vmem_cap = _vmem_capacity_bytes()
    if vmem_cap >= (96 << 20):      # v5e / v6e: 128 MiB physical VMEM
        budget = 48 << 20
    else:                           # v7x: 64 MiB per TensorCore
        budget = 24 << 20

    # Live VMEM per tile row: double-buffered input + output (4*itemsize) plus
    # ~3 full-width f32 compute temporaries (x_f32, centered, centered^2).
    per_row_bytes = d * (4 * itemsize + 16)

    if rows < row_align:
        # Tiny input: single block equal to the full array (always legal).
        block_rows = rows
    else:
        rows_floor = (rows // row_align) * row_align
        block_rows = max(row_align,
                         (budget // per_row_bytes) // row_align * row_align)
        block_rows = min(block_rows, _MAX_BLOCK_ROWS, rows_floor)
        # Ensure >= 2 grid steps when the input allows, so the DMA/compute
        # pipeline has work to overlap and v7x's two TensorCores both get work.
        if block_rows >= rows and rows >= 2 * row_align:
            block_rows = _round_up(_cdiv(rows, 2), row_align)
        # Best-effort even block count (v7x megacore balance).
        num_blocks = _cdiv(rows, block_rows)
        if num_blocks % 2 == 1 and num_blocks > 1:
            cand = _round_up(_cdiv(rows, num_blocks + 1), row_align)
            if cand >= row_align and _cdiv(rows, cand) % 2 == 0:
                block_rows = cand

    num_blocks = _cdiv(rows, block_rows)

    kernel = functools.partial(_layernorm_kernel, eps=eps)

    tile_bytes = block_rows * d * itemsize
    need = 4 * tile_bytes + 3 * block_rows * d * 4 + (4 << 20)
    vmem_limit = int(min(max(need, 32 << 20), (vmem_cap * 3) // 4))

    cost = pl.CostEstimate(
        flops=6 * rows * d,
        transcendentals=2 * rows,
        bytes_accessed=2 * rows * d * itemsize,
    )

    out2d = pl.pallas_call(
        kernel,
        out_shape=jax.ShapeDtypeStruct((rows, d), x.dtype),
        grid=(num_blocks,),
        in_specs=[
            # Last block dim == full D (no column padding needed); row axis may
            # be ragged on the last block.
            pl.BlockSpec((block_rows, d), lambda i: (i, 0)),
            pl.BlockSpec(memory_space=pltpu.MemorySpace.SMEM),
            pl.BlockSpec(memory_space=pltpu.MemorySpace.SMEM),
        ],
        out_specs=pl.BlockSpec((block_rows, d), lambda i: (i, 0)),
        compiler_params=pltpu.CompilerParams(
            dimension_semantics=("parallel",),
            vmem_limit_bytes=vmem_limit,
        ),
        cost_estimate=cost,
        # TODO(synk): if an xprof trace on v7x shows exposed DMA at step
        # boundaries, add pipeline_mode=pl.Buffered(3) to the input BlockSpec.
    )(x2d, alpha, beta)

    return out2d.reshape(orig_shape)


# ------------------------------- reference ----------------------------------

def _layernorm_ref(x, alpha, beta, eps=1e-6):
    mean = jnp.mean(x, axis=-1, keepdims=True)
    d = x.shape[-1]
    std = jnp.sqrt(jnp.sum((x - mean) ** 2, axis=-1, keepdims=True) / (d - 1))
    return alpha[0] * (x - mean) / (std + eps) + beta[0]


# --------------------------------- main --------------------------------------

if __name__ == "__main__":
    key = jax.random.PRNGKey(0)
    B, S, D = 2, 8, 32  # batch, seq len, hidden size

    kx, k2, k3 = jax.random.split(key, 3)

    # Parameters matching nn.Parameter(torch.ones(1)) / nn.Parameter(torch.zeros(1)).
    alpha = jnp.ones((1,), dtype=jnp.float32)
    beta = jnp.zeros((1,), dtype=jnp.float32)

    # 1) Module-shaped input (hidden dim not a multiple of 128 -> lane masking).
    x = jax.random.normal(kx, (B, S, D), dtype=jnp.float32)
    out = jax.block_until_ready(pallas_layernorm(x, alpha, beta, eps=1e-6))
    ref = _layernorm_ref(x, alpha, beta)
    assert out.shape == (B, S, D)
    assert jnp.allclose(out, ref, atol=1e-5, rtol=1e-5)

    # 2) Lane-dense hidden size (full 128-lane path).
    x2 = jax.random.normal(k2, (B, S, 128), dtype=jnp.float32)
    out2 = jax.block_until_ready(pallas_layernorm(x2, alpha, beta))
    ref2 = _layernorm_ref(x2, alpha, beta)
    assert jnp.allclose(out2, ref2, atol=1e-5, rtol=1e-5)

    # 3) Ragged row count (rows % block_rows != 0) and D % 128 != 0:
    #    exercises the no-pad / partial-tail-block path.
    x3 = jax.random.normal(k3, (3, 5, 96), dtype=jnp.float32)
    out3 = jax.block_until_ready(pallas_layernorm(x3, alpha, beta))
    ref3 = _layernorm_ref(x3, alpha, beta)
    assert jnp.allclose(out3, ref3, atol=1e-5, rtol=1e-5)

    print("KERNEL_OK")
</pallas_src>

<mosaic_0001>
module attributes {stable_mosaic.version = 11 : i64} {
  func.func @_layernorm_kernel(%arg0: i32, %arg1: memref<8x32xf32, #tpu.memory_space<vmem>>, %arg2: memref<1xf32, #tpu.memory_space<smem>>, %arg3: memref<1xf32, #tpu.memory_space<smem>>, %arg4: memref<8x32xf32, #tpu.memory_space<vmem>>) attributes {dimension_semantics = [#tpu.dimension_semantics<parallel>], iteration_bounds = array<i64: 2>, scalar_prefetch = 0 : i64, scratch_operands = 0 : i64, tpu.core_type = #tpu.core_type<tc>, window_params = [{transform_indices = @transform_0, window_bounds = array<i64: 8, 32>}, {transform_indices = @transform_1, window_bounds = array<i64: 1>}, {transform_indices = @transform_2, window_bounds = array<i64: 1>}, {transform_indices = @transform_3, window_bounds = array<i64: 8, 32>}]} {
    %c0 = arith.constant 0 : index
    %c0_0 = arith.constant 0 : index
    %0 = vector.load %arg1[%c0, %c0_0] : memref<8x32xf32, #tpu.memory_space<vmem>>, vector<8x32xf32>
    %cst = arith.constant dense<0.000000e+00> : vector<8xf32>
    %1 = vector.multi_reduction <add>, %0, %cst [1] : vector<8x32xf32> to vector<8xf32>
    %2 = vector.shape_cast %1 : vector<8xf32> to vector<8x1xf32>
    %cst_1 = arith.constant 3.125000e-02 : f32
    %3 = vector.broadcast %cst_1 : f32 to vector<8x1xf32>
    %4 = arith.mulf %2, %3 : vector<8x1xf32>
    %5 = vector.broadcast %4 : vector<8x1xf32> to vector<8x32xf32>
    %6 = arith.subf %0, %5 : vector<8x32xf32>
    %7 = arith.mulf %6, %6 : vector<8x32xf32>
    %cst_2 = arith.constant dense<0.000000e+00> : vector<8xf32>
    %8 = vector.multi_reduction <add>, %7, %cst_2 [1] : vector<8x32xf32> to vector<8xf32>
    %9 = vector.shape_cast %8 : vector<8xf32> to vector<8x1xf32>
    %cst_3 = arith.constant 0.0322580636 : f32
    %10 = vector.broadcast %cst_3 : f32 to vector<8x1xf32>
    %11 = arith.mulf %9, %10 : vector<8x1xf32>
    %12 = math.sqrt %11 : vector<8x1xf32>
    %cst_4 = arith.constant 9.99999997E-7 : f32
    %13 = vector.broadcast %cst_4 : f32 to vector<8x1xf32>
    %14 = arith.addf %12, %13 : vector<8x1xf32>
    %15 = tpu.reciprocal %14 : vector<8x1xf32> -> vector<8x1xf32>
    %c0_5 = arith.constant 0 : index
    %16 = memref.load %arg2[%c0_5] : memref<1xf32, #tpu.memory_space<smem>>
    %17 = vector.broadcast %16 : f32 to vector<8x1xf32>
    %18 = arith.mulf %17, %15 : vector<8x1xf32>
    %19 = vector.broadcast %18 : vector<8x1xf32> to vector<8x32xf32>
    %20 = arith.mulf %6, %19 : vector<8x32xf32>
    %c0_6 = arith.constant 0 : index
    %21 = memref.load %arg3[%c0_6] : memref<1xf32, #tpu.memory_space<smem>>
    %22 = vector.broadcast %21 : f32 to vector<8x32xf32>
    %23 = arith.addf %20, %22 : vector<8x32xf32>
    %c0_7 = arith.constant 0 : index
    %c0_8 = arith.constant 0 : index
    %24 = vector.load %arg4[%c0_7, %c0_8] : memref<8x32xf32, #tpu.memory_space<vmem>>, vector<8x32xf32>
    tpu.vector_store %arg4[%c0_7, %c0_8], %23 {strides = array<i32>} : memref<8x32xf32, #tpu.memory_space<vmem>>, vector<8x32xf32>,
    return
  }
  func.func @transform_0(%arg0: i32) -> (i32, i32) {
    %c0_i32 = arith.constant 0 : i32
    %c0_i32_0 = arith.constant 0 : i32
    return %arg0, %c0_i32 : i32, i32
  }
  func.func @transform_1(%arg0: i32) -> i32 {
    %c0_i32 = arith.constant 0 : i32
    %c0_i32_0 = arith.constant 0 : i32
    return %c0_i32 : i32
  }
  func.func @transform_2(%arg0: i32) -> i32 {
    %c0_i32 = arith.constant 0 : i32
    %c0_i32_0 = arith.constant 0 : i32
    return %c0_i32 : i32
  }
  func.func @transform_3(%arg0: i32) -> (i32, i32) {
    %c0_i32 = arith.constant 0 : i32
    %c0_i32_0 = arith.constant 0 : i32
    return %arg0, %c0_i32 : i32, i32
  }
}

</mosaic_0001>

<llo_original>
// kernel: tpu_custom_call.1
$region0: #{tpu_custom_call.1}
  #allocation0 [shape = 'u32[]', space=smem, size = 0x4, offset = 0x4, fixed_abs, tag = 'smem constant byte address 0x4 - core index']
  #allocation1 [shape = 'u32[72,128]{1,0:T(1,128)}', space=vmem, size = 0x9000, scoped, tag = 'internal scratch']
  #allocation2 [shape = 'f32[1]{0:T(128)S(6)}', space=smem, size = 0x200, scoped, tag = 'scoped memory for tpu_custom_call.1']
  #allocation3 [shape = 'f32[1]{0:T(128)S(6)}', space=smem, size = 0x200, scoped, tag = 'scoped memory for tpu_custom_call.1']
  %s0 = inlined_call_operand.hbm [shape: f32[16,32], index: 0, kind: input, shape index: {}]
  %s1 = inlined_call_operand.<no memory space> [shape: f32[1], index: 1, kind: input, shape index: {}]
  %s2 = inlined_call_operand.<no memory space> [shape: f32[1], index: 2, kind: input, shape index: {}]
  %s3 = inlined_call_operand.hbm [shape: f32[16,32], index: 3, kind: output, shape index: {}]
  %s4 = sld [smem:[#allocation0]]
  $region49: #{tpu_custom_call.1} parent=0
    _
  %s6 = ssub.s32 1, %s4
  %s7 = scalar_select 0, %s6, %s4
  %8 = sst [smem:[#allocation2]] %s1
  %9 = sst [smem:[#allocation3]] %s2
  $region1: #{tpu_custom_call.1} parent=0
    #allocation4 [shape = 'u8[8192]{0}', space=vmem, size = 0x2000, scoped, tag = 'input window, operand 0']
    #allocation5 [shape = 's32[2]{0}', space=sflag, size = 0x8, scoped, tag = 'scoped memory for tpu_custom_call.1']
    #allocation6 [shape = 's32[2]{0}', space=sflag, size = 0x8, scoped, tag = 'scoped memory for tpu_custom_call.1']
    #allocation7 [shape = 'u8[8192]{0}', space=vmem, size = 0x2000, scoped, tag = 'output window, operand 0']
    %10 = vsyncpa [#allocation5], 0
    %s11 = scalar_lea.sflag [#allocation5], 1
    %12 = vsyncpa %s11, 0
    %13 = vsyncpa [#allocation6], 0
    %s14 = scalar_lea.sflag [#allocation6], 1
    %15 = vsyncpa %s14, 0
    loop: start=0, step=1, limit=4
    $region2: #{tpu_custom_call.1} parent=1 // loop_pre_header
      _
    $region3: #{tpu_custom_call.1} parent=1 // loop_header
      %s17 = sphi 0, %s21
      %p18 = scmp.ge.s32.totalorder %s17, 4
      %s27 = sphi 0, %s29
      %s30 = sphi 0, %s27
      %s31 = sphi 0, %s30
      %s47 = sphi 0, %s31
      %s51 = sphi 0, %s51
      %s53 = sphi 0, %s51
      %s54 = sphi 0, %s53
      %s68 = sphi 0, %s54
      %s72 = sphi 0, %s72
      %s74 = sphi 0, %s72
      %s75 = sphi 0, %s74
      %s89 = sphi 0, %s75
      %s95 = sphi 0, %s97
      %s98 = sphi 0, %s95
      %s99 = sphi 0, %s98
      %s115 = sphi 0, %s99
    $region4: #{tpu_custom_call.1} parent=1 // loop_header_branch
      %20 = sbr.rel (%p18) target = $region8
    $region5: #{tpu_custom_call.1} parent=1 // loop_body
      %s22 = ssub.s32 %s17, 1
      %s23 = ssub.s32 %s17, 2
      %s24 = sadd.s32 %s17, 1
      %s25 = ssub.s32 %s17, %s24
      %p26 = scmp.eq.s32.totalorder %s25, 0
      %s28 = sadd.s32 %s27, 1
      %s29 = scalar_select %p26, %s27, %s28
      %p32 = pneg %p26
      %p33 = scmp.eq.s32.totalorder %s17, 1
      %p34 = por %p32, %p33
      %p35 = scmp.ne.s32.totalorder %s27, %s30
      %p36 = scmp.eq.s32.totalorder %s17, 0
      %p37 = por %p35, %p36
      %p38 = scmp.ne.s32.totalorder %s27, %s30
      %p39 = scmp.eq.s32.totalorder %s22, 1
      %p40 = por %p38, %p39
      %p41 = scmp.ne.s32.totalorder %s30, %s31
      %p42 = scmp.eq.s32.totalorder %s22, 0
      %p43 = por %p41, %p42
      %p44 = scmp.ne.s32.totalorder %s30, %s31
      %p45 = scmp.eq.s32.totalorder %s23, 1
      %p46 = por %p44, %p45
      %p48 = scmp.ne.s32.totalorder %s31, %s47
      %p49 = scmp.eq.s32.totalorder %s23, 0
      %p50 = por %p48, %p49
      %s52 = sadd.s32 %s51, 1
      %p55 = scmp.eq.s32.totalorder %s17, 1
      %p56 = scmp.ne.s32.totalorder %s51, %s53
      %p57 = scmp.eq.s32.totalorder %s17, 0
      %p58 = por %p56, %p57
      %p59 = scmp.ne.s32.totalorder %s51, %s53
      %p60 = scmp.eq.s32.totalorder %s22, 1
      %p61 = por %p59, %p60
      %p62 = scmp.ne.s32.totalorder %s53, %s54
      %p63 = scmp.eq.s32.totalorder %s22, 0
      %p64 = por %p62, %p63
      %p65 = scmp.ne.s32.totalorder %s53, %s54
      %p66 = scmp.eq.s32.totalorder %s23, 1
      %p67 = por %p65, %p66
      %p69 = scmp.ne.s32.totalorder %s54, %s68
      %p70 = scmp.eq.s32.totalorder %s23, 0
      %p71 = por %p69, %p70
      %s73 = sadd.s32 %s72, 1
      %p76 = scmp.eq.s32.totalorder %s17, 1
      %p77 = scmp.ne.s32.totalorder %s72, %s74
      %p78 = scmp.eq.s32.totalorder %s17, 0
      %p79 = por %p77, %p78
      %p80 = scmp.ne.s32.totalorder %s72, %s74
      %p81 = scmp.eq.s32.totalorder %s22, 1
      %p82 = por %p80, %p81
      %p83 = scmp.ne.s32.totalorder %s74, %s75
      %p84 = scmp.eq.s32.totalorder %s22, 0
      %p85 = por %p83, %p84
      %p86 = scmp.ne.s32.totalorder %s74, %s75
      %p87 = scmp.eq.s32.totalorder %s23, 1
      %p88 = por %p86, %p87
      %p90 = scmp.ne.s32.totalorder %s75, %s89
      %p91 = scmp.eq.s32.totalorder %s23, 0
      %p92 = por %p90, %p91
      %s93 = ssub.s32 %s17, %s24
      %p94 = scmp.eq.s32.totalorder %s93, 0
      %s96 = sadd.s32 %s95, 1
      %s97 = scalar_select %p94, %s95, %s96
      %p100 = pneg %p94
      %p101 = scmp.eq.s32.totalorder %s17, 1
      %p102 = por %p100, %p101
      %p103 = scmp.ne.s32.totalorder %s95, %s98
      %p104 = scmp.eq.s32.totalorder %s17, 0
      %p105 = por %p103, %p104
      %p106 = scmp.ne.s32.totalorder %s95, %s98
      %p107 = scmp.eq.s32.totalorder %s22, 1
      %p108 = por %p106, %p107
      %p109 = scmp.ne.s32.totalorder %s98, %s99
      %p110 = scmp.eq.s32.totalorder %s22, 0
      %p111 = por %p109, %p110
      %p112 = scmp.ne.s32.totalorder %s98, %s99
      %p113 = scmp.eq.s32.totalorder %s23, 1
      %p114 = por %p112, %p113
      %p116 = scmp.ne.s32.totalorder %s99, %s115
      %p117 = scmp.eq.s32.totalorder %s23, 0
      %p118 = por %p116, %p117
      %p119 = scmp.le.s32.totalorder 1, %s17
      %p120 = scmp.lt.s32.totalorder %s17, 3
      %p121 = pnand %p119, %p120
      %p122 = pneg %p121
      // Predicated region
      $region9: #{tpu_custom_call.1} parent=5 // pred_check
        _
      $region10: #{tpu_custom_call.1} parent=5 // pred_check_branch
        %124 = sbr.rel (%p121) target = $region12
      $region11: #{tpu_custom_call.1} parent=5 // pred_region
        %s125 = ssub.s32 %s17, 1
        // Predicated region
        $region13: #{tpu_custom_call.1} parent=11 // pred_check
          %p126 = pneg %p64
        $region14: #{tpu_custom_call.1} parent=11 // pred_check_branch
          %128 = sbr.rel (%p126) target = $region16
        $region15: #{tpu_custom_call.1} parent=11 // pred_region
          _
        $region16: #{tpu_custom_call.1} parent=11 // pred_fallthru
          _
        // Predicated region
        $region17: #{tpu_custom_call.1} parent=11 // pred_check
          %p129 = pneg %p85
        $region18: #{tpu_custom_call.1} parent=11 // pred_check_branch
          %131 = sbr.rel (%p129) target = $region20
        $region19: #{tpu_custom_call.1} parent=11 // pred_region
          _
        $region20: #{tpu_custom_call.1} parent=11 // pred_fallthru
          _
      $region12: #{tpu_custom_call.1} parent=5 // pred_fallthru
        _
      %p132 = scmp.lt.s32.totalorder %s17, 2
      // Predicated region
      $region21: #{tpu_custom_call.1} parent=5 // pred_check
        %p133 = pneg %p132
      $region22: #{tpu_custom_call.1} parent=5 // pred_check_branch
        %135 = sbr.rel (%p133) target = $region24
      $region23: #{tpu_custom_call.1} parent=5 // pred_region
        // Predicated region
        $region25: #{tpu_custom_call.1} parent=23 // pred_check
          %p136 = pneg %p37
        $region26: #{tpu_custom_call.1} parent=23 // pred_check_branch
          %138 = sbr.rel (%p136) target = $region28
        $region27: #{tpu_custom_call.1} parent=23 // pred_region
          %s139 = sand.u32 %s27, 1
          %s140 = scalar_lea.sflag [#allocation5], %s139
          %s141 = sand.u32 %s27, 1
          %s142 = smul.addr %s141, 8
          %s143 = scalar_lea.vmem [#allocation4], %s142
          %145 = vsyncadd %s140, 0
          %s146 = smul.addr %s17, 8
          %s147 = scalar_lea.hbm %s0, %s146
          %s149 = sshll.u32 %s147, 4
          %s150 = int_to_ptr.hbm [resolvable:$true] %s149
          %s151 = sshll.u32 %s143, 4
          %s152 = int_to_ptr.vmem [resolvable:$true] %s151
          %154 = dma.hbm_to_vmem [thread:$0]  %s150, 128, %s152, %s140
        $region28: #{tpu_custom_call.1} parent=23 // pred_fallthru
          _
      $region24: #{tpu_custom_call.1} parent=5 // pred_fallthru
        _
      %p155 = scmp.le.s32.totalorder 1, %s17
      %p156 = scmp.lt.s32.totalorder %s17, 3
      %p157 = pnand %p155, %p156
      %p158 = pneg %p157
      // Predicated region
      $region29: #{tpu_custom_call.1} parent=5 // pred_check
        _
      $region30: #{tpu_custom_call.1} parent=5 // pred_check_branch
        %160 = sbr.rel (%p157) target = $region32
      $region31: #{tpu_custom_call.1} parent=5 // pred_region
        %s161 = ssub.s32 %s17, 1
        %s162 = sand.u32 %s30, 1
        %s163 = scalar_lea.sflag [#allocation5], %s162
        %s164 = sand.u32 %s30, 1
        %s165 = smul.addr %s164, 8
        %s166 = scalar_lea.vmem [#allocation4], %s165
        // Predicated region
        $region33: #{tpu_custom_call.1} parent=31 // pred_check
          %p167 = pneg %p43
        $region34: #{tpu_custom_call.1} parent=31 // pred_check_branch
          %169 = sbr.rel (%p167) target = $region36
        $region35: #{tpu_custom_call.1} parent=31 // pred_region
          %171 = dma.done %s163, 128
        $region36: #{tpu_custom_call.1} parent=31 // pred_fallthru
          _
        %s172 = sand.u32 %s30, 1
        %s173 = scalar_lea.sflag [#allocation5], %s172
        %s174 = sand.u32 %s30, 1
        %s175 = smul.addr %s174, 8
        %s176 = scalar_lea.vmem [#allocation4], %s175
        %p177 = pneg %p43
        %p178 = pneg %p40
        %p179 = pneg %p64
        %p180 = pneg %p61
        %p181 = pneg %p85
        %p182 = pneg %p82
        %p183 = pneg %p111
        %p184 = pneg %p108
        %s185 = sand.u32 %s98, 1
        %s186 = scalar_lea.sflag [#allocation6], %s185
        %s187 = sand.u32 %s98, 1
        %s188 = smul.addr %s187, 8
        %s189 = scalar_lea.vmem [#allocation7], %s188
        %v190 = vld [vmem:[%s166] sm:$0xff]
        %vm191 = vcmask 261120
        %v192 = vsel %vm191, %v190, 0.0
        %193 = vadd.xlane.f32.xlu0 %v192
        %v194 = vpop.xlane.xlu0 %193
        %v195 = vmul.f32 %v194, 0.03125
        %v196 = vsub.f32 %v190, %v195
        %v197 = vmul.f32 %v196, %v196
        %v198 = vsel %vm191, %v197, 0.0
        %199 = vadd.xlane.f32.xlu0 %v198
        %v200 = vpop.xlane.xlu0 %199
        %v201 = vmul.f32 %v200, 0.032258064
        %v202 = vrsqrt.pop %v201
        %v203 = vmul.f32 %v202, %v201
        %v204 = vmul.f32 %v203, %v202
        %v205 = vmul.f32 0.5, %v204
        %v206 = vsub.f32 1.5, %v205
        %v207 = vmul.f32 %v202, %v206
        %v208 = vmul.f32 %v201, %v207
        %vm209 = vcmp.eq.f32.partialorder %v201, inf
        %v210 = vsel %vm209, %v201, %v208
        %vm211 = vcmp.eq.f32.partialorder %v201, 0.0
        %v212 = vand.u32 %v201, 2147483648
        %v213 = vsel %vm211, %v212, %v210
        %v214 = vadd.f32 %v213, 1e-06
        %v215 = vrcp.pop %v214
        %v216 = vmul.f32 %v214, %v215
        %v217 = vsub.f32 1.0, %v216
        %v218 = vmul.f32 %v215, %v217
        %v219 = vadd.f32 %v215, %v218
        %vm220 = vweird.f32 %v214
        %vm221 = vweird.f32 %v215
        %vm222 = vmor %vm220, %vm221
        %v223 = vsel %vm222, %v215, %v219
        %v224 = vand.u32 2147483647, %v214
        %vm225 = vcmp.eq.f32.partialorder %v224, 8.507059e+37
        %v226 = vand.u32 %v214, 2147483648
        %v227 = vor.u32 1.1754944e-38, %v226
        %v228 = vsel %vm225, %v227, %v223
        %s229 = sld [smem:[#allocation2]]
        %v230 = vstv %s229
        %v231 = vmul.f32 %v230, %v228
        %v232 = vmul.f32 %v196, %v231
        %s233 = sld [smem:[#allocation3]]
        %v234 = vstv %s233
        %v235 = vadd.f32 %v232, %v234
        %236 = vst.msk [vmem:[%s189] sm:$0xff] %vm191, %v235
        %s237 = sand.u32 %s98, 1
        %s238 = scalar_lea.sflag [#allocation6], %s237
        %s239 = sand.u32 %s98, 1
        %s240 = smul.addr %s239, 8
        %s241 = scalar_lea.vmem [#allocation7], %s240
        // Predicated region
        $region37: #{tpu_custom_call.1} parent=31 // pred_check
          %p242 = pneg %p108
        $region38: #{tpu_custom_call.1} parent=31 // pred_check_branch
          %244 = sbr.rel (%p242) target = $region40
        $region39: #{tpu_custom_call.1} parent=31 // pred_region
          %246 = vsyncadd %s238, 0
          %s247 = smul.addr %s22, 8
          %s248 = scalar_lea.hbm %s3, %s247
          %s250 = sshll.u32 %s241, 4
          %s251 = int_to_ptr.vmem [resolvable:$true] %s250
          %s252 = sshll.u32 %s248, 4
          %s253 = int_to_ptr.hbm [resolvable:$true] %s252
          %255 = dma.vmem_to_hbm [thread:$0]  %s251, 128, %s253, %s238
        $region40: #{tpu_custom_call.1} parent=31 // pred_fallthru
          _
      $region32: #{tpu_custom_call.1} parent=5 // pred_fallthru
        _
      %p256 = scmp.le.s32.totalorder 2, %s17
      // Predicated region
      $region41: #{tpu_custom_call.1} parent=5 // pred_check
        %p257 = pneg %p256
      $region42: #{tpu_custom_call.1} parent=5 // pred_check_branch
        %259 = sbr.rel (%p257) target = $region44
      $region43: #{tpu_custom_call.1} parent=5 // pred_region
        %s260 = ssub.s32 %s17, 2
        // Predicated region
        $region45: #{tpu_custom_call.1} parent=43 // pred_check
          %p261 = pneg %p114
        $region46: #{tpu_custom_call.1} parent=43 // pred_check_branch
          %263 = sbr.rel (%p261) target = $region48
        $region47: #{tpu_custom_call.1} parent=43 // pred_region
          %s264 = sand.u32 %s99, 1
          %s265 = scalar_lea.sflag [#allocation6], %s264
          %s266 = sand.u32 %s99, 1
          %s267 = smul.addr %s266, 8
          %s268 = scalar_lea.vmem [#allocation7], %s267
          %270 = dma.done %s265, 128
        $region48: #{tpu_custom_call.1} parent=43 // pred_fallthru
          _
      $region44: #{tpu_custom_call.1} parent=5 // pred_fallthru
        _
    $region6: #{tpu_custom_call.1} parent=1 // loop_footer
      %s21 = sadd.s32 1, %s17
    $region7: #{tpu_custom_call.1} parent=1 // loop_footer_branch
      %16 = sbr.rel target = $region3
    $region8: #{tpu_custom_call.1} parent=1 // loop_exit
      _
    %271 = vsyncpa [#allocation5], 1
    %s272 = scalar_lea.sflag [#allocation5], 1
    %273 = vsyncpa %s272, 1
    %274 = vsyncpa [#allocation6], 1
    %s275 = scalar_lea.sflag [#allocation6], 1
    %276 = vsyncpa %s275, 1

</llo_original>
